<compile_context>
chip_gen: v6e
topology: v6e:2x2x1
jax: 0.10.0
libtpu: 0.0.40
codegen_flags: <defaults>
</compile_context>

<pallas_src>
from functools import partial

import numpy as np
import jax
import jax.numpy as jnp
from jax.experimental import pallas as pl
from jax.experimental.pallas import tpu as pltpu


# ----------------------------------------------------------------------------
# Averaging-matrix construction (host-side numpy -> constant under jit).
# ----------------------------------------------------------------------------
def build_avg_matrix(L, kernel_size, stride):
    """(L_out, L) float32 matrix encoding replicate-padded AvgPool1d."""
    pad = (kernel_size - 1) // 2
    L_out = (L + 2 * pad - kernel_size) // stride + 1
    A = np.zeros((L_out, L), dtype=np.float32)
    for i in range(L_out):
        for t in range(kernel_size):
            # padded[j] == x[clip(j - pad, 0, L-1)]  (replicate padding)
            src = min(max(i * stride + t - pad, 0), L - 1)
            A[i, src] += 1.0
    A *= np.float32(1.0 / kernel_size)
    return jnp.asarray(A)                                     # (L_out, L)


def _pick_batch_block(B, L, L_out, D, budget_bytes):
    """Largest divisor of B whose double-buffered in+out tiles fit the budget,
    capped so the grid keeps >= 2 steps when B >= 2 (v7x megacore sharding)."""
    slab_bytes = (L + L_out) * D * 4                          # one batch elem in+out
    a_bytes = 2 * L_out * L * 4                               # A (double-buffered)
    max_blk = max(1, (budget_bytes - a_bytes) // (2 * slab_bytes))
    if B >= 2:
        max_blk = min(max_blk, -(-B // 2))                    # keep >= 2 grid steps
    b_blk = 1
    for d in range(1, B + 1):
        if B % d == 0 and d <= max_blk:
            b_blk = d
    return b_blk


# ----------------------------------------------------------------------------
# Kernel: B_blk unrolled MXU matmuls, (L_out, L) @ (L, D) each.
# ----------------------------------------------------------------------------
def moving_avg_kernel(a_ref, x_ref, o_ref):
    a = a_ref[...]                                            # hoisted, reused per slab
    for b in range(x_ref.shape[0]):                           # static unroll over B_blk
        o_ref[b] = jnp.dot(a, x_ref[b], preferred_element_type=jnp.float32)


# ----------------------------------------------------------------------------
# Wrapper (jit'ed; kernel_size / stride static so A constant-folds).
# ----------------------------------------------------------------------------
_VMEM_LIMIT = 32 << 20          # explicit scoped-VMEM limit (safe on v5e/v6e/v7x)
_VMEM_BUDGET = 24 << 20         # tile-planning budget with headroom under the limit


@partial(jax.jit, static_argnames=("kernel_size", "stride"))
def moving_avg_forward(x, kernel_size, stride):
    """x: (B, L, D) float32 -> (B, L_out, D) float32, matching torch moving_avg."""
    B, L, D = x.shape
    A = build_avg_matrix(L, kernel_size, stride)
    L_out = A.shape[0]
    b_blk = _pick_batch_block(B, L, L_out, D, _VMEM_BUDGET)
    grid = (B // b_blk,)

    return pl.pallas_call(
        moving_avg_kernel,
        out_shape=jax.ShapeDtypeStruct((B, L_out, D), jnp.float32),
        grid=grid,
        in_specs=[
            pl.BlockSpec((L_out, L), lambda b: (0, 0)),          # averaging matrix (shared)
            pl.BlockSpec((b_blk, L, D), lambda b: (b, 0, 0)),    # B_blk slabs per step
        ],
        out_specs=pl.BlockSpec((b_blk, L_out, D), lambda b: (b, 0, 0)),
        compiler_params=pltpu.CompilerParams(
            dimension_semantics=("parallel",),                   # shard steps across TCs
            vmem_limit_bytes=_VMEM_LIMIT,
        ),
    )(A, x)


# ----------------------------------------------------------------------------
# Pure-jnp reference (replicate-pad + AvgPool1d) for a silent check.
# ----------------------------------------------------------------------------
def ref_forward(x, kernel_size, stride):
    pad = (kernel_size - 1) // 2
    B, L, D = x.shape
    front = jnp.repeat(x[:, 0:1, :], pad, axis=1)
    end = jnp.repeat(x[:, L - 1:L, :], pad, axis=1)
    p = jnp.concatenate([front, x, end], axis=1)              # (B, L + 2*pad, D)
    L_out = (L + 2 * pad - kernel_size) // stride + 1
    wins = jnp.stack(
        [p[:, i * stride:i * stride + kernel_size, :] for i in range(L_out)], axis=1)
    return wins.mean(axis=2)                                   # (B, L_out, D)


if __name__ == "__main__":
    key = jax.random.PRNGKey(0)
    B, L, D = 4, 32, 128            # batch=4, seq_len=32, d_model=128 (lane-dense)
    x = jax.random.normal(key, (B, L, D), dtype=jnp.float32)

    # Config used by series_decomp in RTime.py: kernel_size=7, stride=1.
    out = moving_avg_forward(x, kernel_size=7, stride=1)
    jax.block_until_ready(out)
    ref = ref_forward(x, kernel_size=7, stride=1)
    assert out.shape == ref.shape
    assert jnp.allclose(out, ref, atol=1e-5, rtol=1e-5)

    # Also exercise a strided config to cover the general module signature.
    out2 = moving_avg_forward(x, kernel_size=5, stride=2)
    jax.block_until_ready(out2)
    ref2 = ref_forward(x, kernel_size=5, stride=2)
    assert out2.shape == ref2.shape
    assert jnp.allclose(out2, ref2, atol=1e-5, rtol=1e-5)

    print("KERNEL_OK")
</pallas_src>

<mosaic_0001>
module attributes {stable_mosaic.version = 11 : i64} {
  func.func @moving_avg_kernel(%arg0: i32, %arg1: memref<32x32xf32, #tpu.memory_space<vmem>>, %arg2: memref<2x32x128xf32, #tpu.memory_space<vmem>>, %arg3: memref<2x32x128xf32, #tpu.memory_space<vmem>>) attributes {dimension_semantics = [#tpu.dimension_semantics<parallel>], iteration_bounds = array<i64: 2>, scalar_prefetch = 0 : i64, scratch_operands = 0 : i64, tpu.core_type = #tpu.core_type<tc>, window_params = [{pipeline_mode = #tpu.pipeline_mode<synchronous>, transform_indices = @transform_0, window_bounds = array<i64: 32, 32>}, {transform_indices = @transform_1, window_bounds = array<i64: 2, 32, 128>}, {transform_indices = @transform_2, window_bounds = array<i64: 2, 32, 128>}]} {
    %c0 = arith.constant 0 : index
    %c0_0 = arith.constant 0 : index
    %0 = vector.load %arg1[%c0, %c0_0] : memref<32x32xf32, #tpu.memory_space<vmem>>, vector<32x32xf32>
    %c0_1 = arith.constant 0 : index
    %c0_2 = arith.constant 0 : index
    %c0_3 = arith.constant 0 : index
    %1 = vector.load %arg2[%c0_1, %c0_2, %c0_3] : memref<2x32x128xf32, #tpu.memory_space<vmem>>, vector<1x32x128xf32>
    %2 = vector.shape_cast %1 : vector<1x32x128xf32> to vector<32x128xf32>
    %cst = arith.constant dense<0.000000e+00> : vector<32x128xf32>
    %3 = tpu.matmul %0, %2, %cst {dimension_numbers = #tpu.dot_dimension_numbers<[1], [0], [0], [1], [0, 0, 1, 1], [], []>} : vector<32x32xf32>, vector<32x128xf32>, vector<32x128xf32> -> vector<32x128xf32>
    %c0_4 = arith.constant 0 : index
    %c0_5 = arith.constant 0 : index
    %c0_6 = arith.constant 0 : index
    %4 = vector.load %arg3[%c0_4, %c0_5, %c0_6] : memref<2x32x128xf32, #tpu.memory_space<vmem>>, vector<1x32x128xf32>
    %5 = vector.shape_cast %4 : vector<1x32x128xf32> to vector<32x128xf32>
    %6 = vector.shape_cast %3 : vector<32x128xf32> to vector<1x32x128xf32>
    tpu.vector_store %arg3[%c0_4, %c0_5, %c0_6], %6 {strides = array<i32>} : memref<2x32x128xf32, #tpu.memory_space<vmem>>, vector<1x32x128xf32>,
    %c1 = arith.constant 1 : index
    %c0_7 = arith.constant 0 : index
    %c0_8 = arith.constant 0 : index
    %7 = vector.load %arg2[%c1, %c0_7, %c0_8] : memref<2x32x128xf32, #tpu.memory_space<vmem>>, vector<1x32x128xf32>
    %8 = vector.shape_cast %7 : vector<1x32x128xf32> to vector<32x128xf32>
    %cst_9 = arith.constant dense<0.000000e+00> : vector<32x128xf32>
    %9 = tpu.matmul %0, %8, %cst_9 {dimension_numbers = #tpu.dot_dimension_numbers<[1], [0], [0], [1], [0, 0, 1, 1], [], []>} : vector<32x32xf32>, vector<32x128xf32>, vector<32x128xf32> -> vector<32x128xf32>
    %c1_10 = arith.constant 1 : index
    %c0_11 = arith.constant 0 : index
    %c0_12 = arith.constant 0 : index
    %10 = vector.load %arg3[%c1_10, %c0_11, %c0_12] : memref<2x32x128xf32, #tpu.memory_space<vmem>>, vector<1x32x128xf32>
    %11 = vector.shape_cast %10 : vector<1x32x128xf32> to vector<32x128xf32>
    %12 = vector.shape_cast %9 : vector<32x128xf32> to vector<1x32x128xf32>
    tpu.vector_store %arg3[%c1_10, %c0_11, %c0_12], %12 {strides = array<i32>} : memref<2x32x128xf32, #tpu.memory_space<vmem>>, vector<1x32x128xf32>,
    return
  }
  func.func @transform_0(%arg0: i32) -> (i32, i32) {
    %c0_i32 = arith.constant 0 : i32
    %c0_i32_0 = arith.constant 0 : i32
    %c0_i32_1 = arith.constant 0 : i32
    return %c0_i32, %c0_i32_0 : i32, i32
  }
  func.func @transform_1(%arg0: i32) -> (i32, i32, i32) {
    %c0_i32 = arith.constant 0 : i32
    %c0_i32_0 = arith.constant 0 : i32
    %c0_i32_1 = arith.constant 0 : i32
    return %arg0, %c0_i32, %c0_i32_0 : i32, i32, i32
  }
  func.func @transform_2(%arg0: i32) -> (i32, i32, i32) {
    %c0_i32 = arith.constant 0 : i32
    %c0_i32_0 = arith.constant 0 : i32
    %c0_i32_1 = arith.constant 0 : i32
    return %arg0, %c0_i32, %c0_i32_0 : i32, i32, i32
  }
}

</mosaic_0001>

<llo_original>
// kernel: moving_avg_forward.1
$region0: #{moving_avg_forward.1}
  #allocation0 [shape = 'u32[]', space=smem, size = 0x4, offset = 0x4, fixed_abs, tag = 'smem constant byte address 0x4 - core index']
  #allocation1 [shape = 'u32[144,128]{1,0:T(1,128)}', space=vmem, size = 0x12000, scoped, tag = 'internal scratch']
  %s0 = inlined_call_operand.hbm [shape: f32[32,32], index: 0, kind: input, shape index: {}]
  %s1 = inlined_call_operand.hbm [shape: f32[4,32,128], index: 1, kind: input, shape index: {}]
  %s2 = inlined_call_operand.hbm [shape: f32[4,32,128], index: 2, kind: output, shape index: {}]
  %s3 = sld [smem:[#allocation0]]
  $region49: #{moving_avg_forward.1} parent=0
    _
  %s5 = ssub.s32 1, %s3
  %s6 = scalar_select 0, %s5, %s3
  $region1: #{moving_avg_forward.1} parent=0
    #allocation2 [shape = 'u8[16384]{0}', space=vmem, size = 0x4000, scoped, tag = 'input window, operand 0, single buffered']
    #allocation3 [shape = 's32[2]{0}', space=sflag, size = 0x8, scoped, tag = 'scoped memory for moving_avg_forward.1']
    #allocation4 [shape = 's32[2]{0}', space=sflag, size = 0x8, scoped, tag = 'scoped memory for moving_avg_forward.1']
    #allocation5 [shape = 'u8[65536]{0}', space=vmem, size = 0x10000, scoped, tag = 'input window, operand 1']
    #allocation6 [shape = 's32[2]{0}', space=sflag, size = 0x8, scoped, tag = 'scoped memory for moving_avg_forward.1']
    #allocation7 [shape = 'u8[65536]{0}', space=vmem, size = 0x10000, scoped, tag = 'output window, operand 0']
    %7 = vsyncpa [#allocation3], 0
    %8 = vsyncpa [#allocation6], 0
    %s9 = scalar_lea.sflag [#allocation6], 1
    %10 = vsyncpa %s9, 0
    %11 = vsyncpa [#allocation4], 0
    %s12 = scalar_lea.sflag [#allocation4], 1
    %13 = vsyncpa %s12, 0
    loop: start=0, step=1, limit=4
    $region2: #{moving_avg_forward.1} parent=1 // loop_pre_header
      _
    $region3: #{moving_avg_forward.1} parent=1 // loop_header
      %s15 = sphi 0, %s19
      %p16 = scmp.ge.s32.totalorder %s15, 4
      %s23 = sphi 0, %s23
      %s25 = sphi 0, %s23
      %s26 = sphi 0, %s25
      %s40 = sphi 0, %s26
      %s46 = sphi 0, %s48
      %s49 = sphi 0, %s46
      %s50 = sphi 0, %s49
      %s66 = sphi 0, %s50
      %s72 = sphi 0, %s74
      %s75 = sphi 0, %s72
      %s76 = sphi 0, %s75
      %s92 = sphi 0, %s76
    $region4: #{moving_avg_forward.1} parent=1 // loop_header_branch
      %18 = sbr.rel (%p16) target = $region8
    $region5: #{moving_avg_forward.1} parent=1 // loop_body
      %s20 = ssub.s32 %s15, 1
      %s21 = ssub.s32 %s15, 2
      %s22 = sadd.s32 %s15, 1
      %s24 = sadd.s32 %s23, 1
      %p27 = scmp.eq.s32.totalorder %s15, 1
      %p28 = scmp.ne.s32.totalorder %s23, %s25
      %p29 = scmp.eq.s32.totalorder %s15, 0
      %p30 = por %p28, %p29
      %p31 = scmp.ne.s32.totalorder %s23, %s25
      %p32 = scmp.eq.s32.totalorder %s20, 1
      %p33 = por %p31, %p32
      %p34 = scmp.ne.s32.totalorder %s25, %s26
      %p35 = scmp.eq.s32.totalorder %s20, 0
      %p36 = por %p34, %p35
      %p37 = scmp.ne.s32.totalorder %s25, %s26
      %p38 = scmp.eq.s32.totalorder %s21, 1
      %p39 = por %p37, %p38
      %p41 = scmp.ne.s32.totalorder %s26, %s40
      %p42 = scmp.eq.s32.totalorder %s21, 0
      %p43 = por %p41, %p42
      %s44 = ssub.s32 %s15, %s22
      %p45 = scmp.eq.s32.totalorder %s44, 0
      %s47 = sadd.s32 %s46, 1
      %s48 = scalar_select %p45, %s46, %s47
      %p51 = pneg %p45
      %p52 = scmp.eq.s32.totalorder %s15, 1
      %p53 = por %p51, %p52
      %p54 = scmp.ne.s32.totalorder %s46, %s49
      %p55 = scmp.eq.s32.totalorder %s15, 0
      %p56 = por %p54, %p55
      %p57 = scmp.ne.s32.totalorder %s46, %s49
      %p58 = scmp.eq.s32.totalorder %s20, 1
      %p59 = por %p57, %p58
      %p60 = scmp.ne.s32.totalorder %s49, %s50
      %p61 = scmp.eq.s32.totalorder %s20, 0
      %p62 = por %p60, %p61
      %p63 = scmp.ne.s32.totalorder %s49, %s50
      %p64 = scmp.eq.s32.totalorder %s21, 1
      %p65 = por %p63, %p64
      %p67 = scmp.ne.s32.totalorder %s50, %s66
      %p68 = scmp.eq.s32.totalorder %s21, 0
      %p69 = por %p67, %p68
      %s70 = ssub.s32 %s15, %s22
      %p71 = scmp.eq.s32.totalorder %s70, 0
      %s73 = sadd.s32 %s72, 1
      %s74 = scalar_select %p71, %s72, %s73
      %p77 = pneg %p71
      %p78 = scmp.eq.s32.totalorder %s15, 1
      %p79 = por %p77, %p78
      %p80 = scmp.ne.s32.totalorder %s72, %s75
      %p81 = scmp.eq.s32.totalorder %s15, 0
      %p82 = por %p80, %p81
      %p83 = scmp.ne.s32.totalorder %s72, %s75
      %p84 = scmp.eq.s32.totalorder %s20, 1
      %p85 = por %p83, %p84
      %p86 = scmp.ne.s32.totalorder %s75, %s76
      %p87 = scmp.eq.s32.totalorder %s20, 0
      %p88 = por %p86, %p87
      %p89 = scmp.ne.s32.totalorder %s75, %s76
      %p90 = scmp.eq.s32.totalorder %s21, 1
      %p91 = por %p89, %p90
      %p93 = scmp.ne.s32.totalorder %s76, %s92
      %p94 = scmp.eq.s32.totalorder %s21, 0
      %p95 = por %p93, %p94
      %p96 = scmp.le.s32.totalorder 1, %s15
      %p97 = scmp.lt.s32.totalorder %s15, 3
      %p98 = pnand %p96, %p97
      %p99 = pneg %p98
      // Predicated region
      $region9: #{moving_avg_forward.1} parent=5 // pred_check
        _
      $region10: #{moving_avg_forward.1} parent=5 // pred_check_branch
        %101 = sbr.rel (%p98) target = $region12
      $region11: #{moving_avg_forward.1} parent=5 // pred_region
        %s102 = ssub.s32 %s15, 1
        // Predicated region
        $region13: #{moving_avg_forward.1} parent=11 // pred_check
          %p103 = pneg %p36
        $region14: #{moving_avg_forward.1} parent=11 // pred_check_branch
          %105 = sbr.rel (%p103) target = $region16
        $region15: #{moving_avg_forward.1} parent=11 // pred_region
          %s107 = ssub.s32 512, 512
          %108 = vsyncadd [#allocation3], %s107
          %s109 = sshll.u32 [#allocation2], 4
          %s110 = int_to_ptr.vmem [resolvable:$true] %s109
          %115 = dma.hbm_to_vmem [thread:$0]  %s0, 512, %s110, [#allocation3], 128, 128, 8
        $region16: #{moving_avg_forward.1} parent=11 // pred_fallthru
          _
      $region12: #{moving_avg_forward.1} parent=5 // pred_fallthru
        _
      %p116 = scmp.lt.s32.totalorder %s15, 2
      // Predicated region
      $region17: #{moving_avg_forward.1} parent=5 // pred_check
        %p117 = pneg %p116
      $region18: #{moving_avg_forward.1} parent=5 // pred_check_branch
        %119 = sbr.rel (%p117) target = $region20
      $region19: #{moving_avg_forward.1} parent=5 // pred_region
        // Predicated region
        $region21: #{moving_avg_forward.1} parent=19 // pred_check
          %p120 = pneg %p56
        $region22: #{moving_avg_forward.1} parent=19 // pred_check_branch
          %122 = sbr.rel (%p120) target = $region24
        $region23: #{moving_avg_forward.1} parent=19 // pred_region
          %s123 = sand.u32 %s46, 1
          %s124 = scalar_lea.sflag [#allocation6], %s123
          %s125 = sand.u32 %s46, 1
          %s126 = smul.addr %s125, 64
          %s127 = scalar_lea.vmem [#allocation5], %s126
          %s128 = smul.u32 2, %s15
          %s130 = ssub.s32 1024, 1024
          %131 = vsyncadd %s124, %s130
          %s132 = smul.addr %s128, 4
          %s133 = smul.addr %s132, 128
          %s134 = scalar_lea.hbm %s1, %s133
          %s135 = sshll.u32 %s127, 4
          %s136 = int_to_ptr.vmem [resolvable:$true] %s135
          %141 = dma.hbm_to_vmem [thread:$0]  %s134, 1024, %s136, %s124, 128, 128, 8
        $region24: #{moving_avg_forward.1} parent=19 // pred_fallthru
          _
      $region20: #{moving_avg_forward.1} parent=5 // pred_fallthru
        _
      %p142 = scmp.le.s32.totalorder 1, %s15
      %p143 = scmp.lt.s32.totalorder %s15, 3
      %p144 = pnand %p142, %p143
      %p145 = pneg %p144
      // Predicated region
      $region25: #{moving_avg_forward.1} parent=5 // pred_check
        _
      $region26: #{moving_avg_forward.1} parent=5 // pred_check_branch
        %147 = sbr.rel (%p144) target = $region28
      $region27: #{moving_avg_forward.1} parent=5 // pred_region
        %s148 = ssub.s32 %s15, 1
        // Predicated region
        $region29: #{moving_avg_forward.1} parent=27 // pred_check
          %p149 = pneg %p36
        $region30: #{moving_avg_forward.1} parent=27 // pred_check_branch
          %151 = sbr.rel (%p149) target = $region32
        $region31: #{moving_avg_forward.1} parent=27 // pred_region
          %152 = dma.done [#allocation3], 512
        $region32: #{moving_avg_forward.1} parent=27 // pred_fallthru
          _
        %s153 = sand.u32 %s49, 1
        %s154 = scalar_lea.sflag [#allocation6], %s153
        %s155 = sand.u32 %s49, 1
        %s156 = smul.addr %s155, 64
        %s157 = scalar_lea.vmem [#allocation5], %s156
        // Predicated region
        $region33: #{moving_avg_forward.1} parent=27 // pred_check
          %p158 = pneg %p62
        $region34: #{moving_avg_forward.1} parent=27 // pred_check_branch
          %160 = sbr.rel (%p158) target = $region36
        $region35: #{moving_avg_forward.1} parent=27 // pred_region
          %161 = dma.done %s154, 1024
        $region36: #{moving_avg_forward.1} parent=27 // pred_fallthru
          _
        %p162 = pneg %p36
        %p163 = pneg %p33
        %s164 = sand.u32 %s49, 1
        %s165 = scalar_lea.sflag [#allocation6], %s164
        %s166 = sand.u32 %s49, 1
        %s167 = smul.addr %s166, 64
        %s168 = scalar_lea.vmem [#allocation5], %s167
        %p169 = pneg %p62
        %p170 = pneg %p59
        %p171 = pneg %p88
        %p172 = pneg %p85
        %s173 = sand.u32 %s75, 1
        %s174 = scalar_lea.sflag [#allocation4], %s173
        %s175 = sand.u32 %s75, 1
        %s176 = smul.addr %s175, 64
        %s177 = scalar_lea.vmem [#allocation7], %s176
        %s178 = smul.u32 2, %s20
        %s179 = smul.u32 2, %s20
        %v180 = vld [vmem:[#allocation2] sm:$0xff]
        %v181 = vld [vmem:[#allocation2 + $0x8] sm:$0xff]
        %v182 = vld [vmem:[#allocation2 + $0x10] sm:$0xff]
        %v183 = vld [vmem:[#allocation2 + $0x18] sm:$0xff]
        %v184 = vld [vmem:[%s157] sm:$0xff]
        %v185 = vld [vmem:[%s157 + $0x8] sm:$0xff]
        %v186 = vld [vmem:[%s157 + $0x10] sm:$0xff]
        %v187 = vld [vmem:[%s157 + $0x18] sm:$0xff]
        %vm188 = vcmask 261120
        %v190 = vsel %vm188, %v180, 0
        %v193 = vsel %vm188, %v181, 0
        %v196 = vsel %vm188, %v182, 0
        %v199 = vsel %vm188, %v183, 0
        %201 = vmatprep.subr.mxu0 0.0
        %202 = vmatpush1.msra.mxu0 0.0
        %203 = vmatprep.subr.mxu0 0.0
        %204 = vmatpush1.msra.mxu0 0.0
        %205 = vmatprep.subr.mxu0 0.0
        %206 = vmatpush1.msra.mxu0 0.0
        %207 = vmatprep.subr.mxu0 0.0
        %208 = vmatpush1.msra.mxu0 0.0
        %209 = vmatprep.subr.mxu0 0.0
        %210 = vmatpush1.msra.mxu0 0.0
        %211 = vmatprep.subr.mxu0 0.0
        %212 = vmatpush1.msra.mxu0 0.0
        %213 = vmatprep.subr.mxu0 0.0
        %214 = vmatpush1.msra.mxu0 0.0
        %215 = vmatprep.subr.mxu0 0.0
        %216 = vmatpush1.msra.mxu0 0.0
        %217 = vmatprep.subr.mxu0 0.0
        %218 = vmatpush1.msra.mxu0 0.0
        %219 = vmatprep.subr.mxu0 0.0
        %220 = vmatpush1.msra.mxu0 0.0
        %221 = vmatprep.subr.mxu0 0.0
        %222 = vmatpush1.msra.mxu0 0.0
        %223 = vmatprep.subr.mxu0 0.0
        %224 = vmatpush1.msra.mxu0 0.0
        %225 = vmatprep.subr.mxu0 0.0
        %226 = vmatpush1.msra.mxu0 %v187
        %227 = vmatprep.subr.mxu0 0.0
        %228 = vmatpush1.msra.mxu0 %v186
        %229 = vmatprep.subr.mxu0 0.0
        %230 = vmatpush1.msra.mxu0 %v185
        %231 = vmatprep.subr.mxu0 0.0
        %232 = vmatpush1.msra.mxu0 %v184
        %233 = vmatprep.subr.mxu0 0.0
        %234 = vmatpush2.msra.mxu0 0.0
        %235 = vmatprep.subr.mxu0 0.0
        %236 = vmatpush2.msra.mxu0 0.0
        %237 = vmatprep.subr.mxu0 0.0
        %238 = vmatpush2.msra.mxu0 0.0
        %239 = vmatprep.subr.mxu0 0.0
        %240 = vmatpush2.msra.mxu0 0.0
        %241 = vmatprep.subr.mxu0 0.0
        %242 = vmatpush2.msra.mxu0 0.0
        %243 = vmatprep.subr.mxu0 0.0
        %244 = vmatpush2.msra.mxu0 0.0
        %245 = vmatprep.subr.mxu0 0.0
        %246 = vmatpush2.msra.mxu0 0.0
        %247 = vmatprep.subr.mxu0 0.0
        %248 = vmatpush2.msra.mxu0 0.0
        %249 = vmatprep.subr.mxu0 0.0
        %250 = vmatpush2.msra.mxu0 0.0
        %251 = vmatprep.subr.mxu0 0.0
        %252 = vmatpush2.msra.mxu0 0.0
        %253 = vmatprep.subr.mxu0 0.0
        %254 = vmatpush2.msra.mxu0 0.0
        %255 = vmatprep.subr.mxu0 0.0
        %256 = vmatpush2.msra.mxu0 0.0
        %257 = vmatprep.subr.mxu0 0.0
        %258 = vmatpush2.msra.mxu0 0.0
        %259 = vmatprep.subr.mxu0 0.0
        %260 = vmatpush2.msra.mxu0 0.0
        %261 = vmatprep.subr.mxu0 0.0
        %262 = vmatpush2.msra.mxu0 0.0
        %263 = vmatprep.subr.mxu0 0.0
        %264 = vmatpush2.msra.mxu0 0.0
        %265 = vmatprep.mubr.f32.mxu0 0.0
        %266 = vmatmul.mubr.f32.gmra.mxu0 %v190
        %v267 = vpop.f32.mrf.mxu0
        %v268 = vadd.f32 0.0, %v267
        %v269 = vpop.f32.mrf.mxu0
        %270 = vmatprep.mubr.f32.mxu0 0.0
        %271 = vmatmul.mubr.f32.gmra.mxu0 %v193
        %v272 = vpop.f32.mrf.mxu0
        %v273 = vadd.f32 0.0, %v272
        %v274 = vpop.f32.mrf.mxu0
        %275 = vmatprep.mubr.f32.mxu0 0.0
        %276 = vmatmul.mubr.f32.gmra.mxu0 %v196
        %v277 = vpop.f32.mrf.mxu0
        %v278 = vadd.f32 0.0, %v277
        %v279 = vpop.f32.mrf.mxu0
        %280 = vmatprep.mubr.f32.mxu0 0.0
        %281 = vmatmul.mubr.f32.gmra.mxu0 %v199
        %v282 = vpop.f32.mrf.mxu0
        %v283 = vadd.f32 0.0, %v282
        %v284 = vpop.f32.mrf.mxu0
        %285 = vdwg.mxu0
        %286 = vst [vmem:[%s177] sm:$0xff] %v268
        %287 = vst [vmem:[%s177 + $0x8] sm:$0xff] %v273
        %288 = vst [vmem:[%s177 + $0x10] sm:$0xff] %v278
        %289 = vst [vmem:[%s177 + $0x18] sm:$0xff] %v283
        %s290 = scalar_lea.vmem %s157, 32 [#allocation5]
        %v291 = vld [vmem:[%s290] sm:$0xff]
        %v292 = vld [vmem:[%s290 + $0x8] sm:$0xff]
        %v293 = vld [vmem:[%s290 + $0x10] sm:$0xff]
        %v294 = vld [vmem:[%s290 + $0x18] sm:$0xff]
        %295 = vmatprep.subr.mxu0 0.0
        %296 = vmatpush1.msra.mxu0 0.0
        %297 = vmatprep.subr.mxu0 0.0
        %298 = vmatpush1.msra.mxu0 0.0
        %299 = vmatprep.subr.mxu0 0.0
        %300 = vmatpush1.msra.mxu0 0.0
        %301 = vmatprep.subr.mxu0 0.0
        %302 = vmatpush1.msra.mxu0 0.0
        %303 = vmatprep.subr.mxu0 0.0
        %304 = vmatpush1.msra.mxu0 0.0
        %305 = vmatprep.subr.mxu0 0.0
        %306 = vmatpush1.msra.mxu0 0.0
        %307 = vmatprep.subr.mxu0 0.0
        %308 = vmatpush1.msra.mxu0 0.0
        %309 = vmatprep.subr.mxu0 0.0
        %310 = vmatpush1.msra.mxu0 0.0
        %311 = vmatprep.subr.mxu0 0.0
        %312 = vmatpush1.msra.mxu0 0.0
        %313 = vmatprep.subr.mxu0 0.0
        %314 = vmatpush1.msra.mxu0 0.0
        %315 = vmatprep.subr.mxu0 0.0
        %316 = vmatpush1.msra.mxu0 0.0
        %317 = vmatprep.subr.mxu0 0.0
        %318 = vmatpush1.msra.mxu0 0.0
        %319 = vmatprep.subr.mxu0 0.0
        %320 = vmatpush1.msra.mxu0 %v294
        %321 = vmatprep.subr.mxu0 0.0
        %322 = vmatpush1.msra.mxu0 %v293
        %323 = vmatprep.subr.mxu0 0.0
        %324 = vmatpush1.msra.mxu0 %v292
        %325 = vmatprep.subr.mxu0 0.0
        %326 = vmatpush1.msra.mxu0 %v291
        %327 = vmatprep.subr.mxu0 0.0
        %328 = vmatpush2.msra.mxu0 0.0
        %329 = vmatprep.subr.mxu0 0.0
        %330 = vmatpush2.msra.mxu0 0.0
        %331 = vmatprep.subr.mxu0 0.0
        %332 = vmatpush2.msra.mxu0 0.0
        %333 = vmatprep.subr.mxu0 0.0
        %334 = vmatpush2.msra.mxu0 0.0
        %335 = vmatprep.subr.mxu0 0.0
        %336 = vmatpush2.msra.mxu0 0.0
        %337 = vmatprep.subr.mxu0 0.0
        %338 = vmatpush2.msra.mxu0 0.0
        %339 = vmatprep.subr.mxu0 0.0
        %340 = vmatpush2.msra.mxu0 0.0
        %341 = vmatprep.subr.mxu0 0.0
        %342 = vmatpush2.msra.mxu0 0.0
        %343 = vmatprep.subr.mxu0 0.0
        %344 = vmatpush2.msra.mxu0 0.0
        %345 = vmatprep.subr.mxu0 0.0
        %346 = vmatpush2.msra.mxu0 0.0
        %347 = vmatprep.subr.mxu0 0.0
        %348 = vmatpush2.msra.mxu0 0.0
        %349 = vmatprep.subr.mxu0 0.0
        %350 = vmatpush2.msra.mxu0 0.0
        %351 = vmatprep.subr.mxu0 0.0
        %352 = vmatpush2.msra.mxu0 0.0
        %353 = vmatprep.subr.mxu0 0.0
        %354 = vmatpush2.msra.mxu0 0.0
        %355 = vmatprep.subr.mxu0 0.0
        %356 = vmatpush2.msra.mxu0 0.0
        %357 = vmatprep.subr.mxu0 0.0
        %358 = vmatpush2.msra.mxu0 0.0
        %359 = vmatprep.mubr.f32.mxu0 0.0
        %360 = vmatmul.mubr.f32.gmra.mxu0 %v190
        %v361 = vpop.f32.mrf.mxu0
        %v362 = vadd.f32 0.0, %v361
        %v363 = vpop.f32.mrf.mxu0
        %364 = vmatprep.mubr.f32.mxu0 0.0
        %365 = vmatmul.mubr.f32.gmra.mxu0 %v193
        %v366 = vpop.f32.mrf.mxu0
        %v367 = vadd.f32 0.0, %v366
        %v368 = vpop.f32.mrf.mxu0
        %369 = vmatprep.mubr.f32.mxu0 0.0
        %370 = vmatmul.mubr.f32.gmra.mxu0 %v196
        %v371 = vpop.f32.mrf.mxu0
        %v372 = vadd.f32 0.0, %v371
        %v373 = vpop.f32.mrf.mxu0
        %374 = vmatprep.mubr.f32.mxu0 0.0
        %375 = vmatmul.mubr.f32.gmra.mxu0 %v199
        %v376 = vpop.f32.mrf.mxu0
        %v377 = vadd.f32 0.0, %v376
        %v378 = vpop.f32.mrf.mxu0
        %379 = vdwg.mxu0
        %s380 = scalar_lea.vmem %s177, 32 [#allocation7]
        %381 = vst [vmem:[%s380] sm:$0xff] %v362
        %382 = vst [vmem:[%s380 + $0x8] sm:$0xff] %v367
        %383 = vst [vmem:[%s380 + $0x10] sm:$0xff] %v372
        %384 = vst [vmem:[%s380 + $0x18] sm:$0xff] %v377
        %s385 = sand.u32 %s75, 1
        %s386 = scalar_lea.sflag [#allocation4], %s385
        %s387 = sand.u32 %s75, 1
        %s388 = smul.addr %s387, 64
        %s389 = scalar_lea.vmem [#allocation7], %s388
        // Predicated region
        $region37: #{moving_avg_forward.1} parent=27 // pred_check
          %p390 = pneg %p85
        $region38: #{moving_avg_forward.1} parent=27 // pred_check_branch
          %392 = sbr.rel (%p390) target = $region40
        $region39: #{moving_avg_forward.1} parent=27 // pred_region
          %s393 = smul.u32 2, %s20
          %s395 = ssub.s32 1024, 1024
          %396 = vsyncadd %s386, %s395
          %s397 = smul.addr %s393, 4
          %s398 = smul.addr %s397, 128
          %s399 = scalar_lea.hbm %s2, %s398
          %s400 = sshll.u32 %s389, 4
          %s401 = int_to_ptr.vmem [resolvable:$true] %s400
          %406 = dma.vmem_to_hbm [thread:$0]  %s401, 1024, %s399, %s386, 128, 128, 8
        $region40: #{moving_avg_forward.1} parent=27 // pred_fallthru
          _
      $region28: #{moving_avg_forward.1} parent=5 // pred_fallthru
        _
      %p407 = scmp.le.s32.totalorder 2, %s15
      // Predicated region
      $region41: #{moving_avg_forward.1} parent=5 // pred_check
        %p408 = pneg %p407
      $region42: #{moving_avg_forward.1} parent=5 // pred_check_branch
        %410 = sbr.rel (%p408) target = $region44
      $region43: #{moving_avg_forward.1} parent=5 // pred_region
        %s411 = ssub.s32 %s15, 2
        // Predicated region
        $region45: #{moving_avg_forward.1} parent=43 // pred_check
          %p412 = pneg %p91
        $region46: #{moving_avg_forward.1} parent=43 // pred_check_branch
          %414 = sbr.rel (%p412) target = $region48
        $region47: #{moving_avg_forward.1} parent=43 // pred_region
          %s415 = sand.u32 %s76, 1
          %s416 = scalar_lea.sflag [#allocation4], %s415
          %s417 = sand.u32 %s76, 1
          %s418 = smul.addr %s417, 64
          %s419 = scalar_lea.vmem [#allocation7], %s418
          %420 = dma.done %s416, 1024
        $region48: #{moving_avg_forward.1} parent=43 // pred_fallthru
          _
      $region44: #{moving_avg_forward.1} parent=5 // pred_fallthru
        _
    $region6: #{moving_avg_forward.1} parent=1 // loop_footer
      %s19 = sadd.s32 1, %s15
    $region7: #{moving_avg_forward.1} parent=1 // loop_footer_branch
      %14 = sbr.rel target = $region3
    $region8: #{moving_avg_forward.1} parent=1 // loop_exit
      _
    %421 = vsyncpa [#allocation3], 1
    %s422 = scalar_lea.sflag [#allocation3], 1
    %423 = vsyncpa %s422, 1
    %424 = vsyncpa [#allocation6], 1
    %s425 = scalar_lea.sflag [#allocation6], 1
    %426 = vsyncpa %s425, 1
    %427 = vsyncpa [#allocation4], 1
    %s428 = scalar_lea.sflag [#allocation4], 1
    %429 = vsyncpa %s428, 1

</llo_original>
